<compile_context>
chip_gen: v5e
topology: v5e:2x2
jax: 0.10.0
libtpu: 0.0.40
codegen_flags: <defaults>
</compile_context>

<pallas_src>
import functools

import jax
import jax.numpy as jnp
from jax import lax
from jax.experimental import pallas as pl
from jax.experimental.pallas import tpu as pltpu


_LANES = 128


# ----------------------------- fused Pallas kernel -------------------------- #

def _fused_loss_kernel(*refs, group_counts, mse_denom):
    """Five per-group sum-of-squares reductions + MSE, one lane-dense store.

    refs = (lam_ref[SMEM], *param_refs[VMEM], yp_ref, yt_ref, o_ref)
    """
    n_params = sum(group_counts)
    lam_ref = refs[0]
    param_refs = refs[1:1 + n_params]
    yp_ref = refs[1 + n_params]
    yt_ref = refs[2 + n_params]
    o_ref = refs[3 + n_params]

    lam = lam_ref[0, 0]                                   # SMEM scalar

    lane = lax.broadcasted_iota(jnp.int32, (1, _LANES), 1)
    out = jnp.zeros((1, _LANES), jnp.float32)

    # Per-group L2 norms: static membership -> plain full-ref reductions.
    # All math in f32 (v5e has no bf16 VPU/EUP path).
    idx = 0
    for g, cnt in enumerate(group_counts):
        ss = jnp.float32(0.0)
        for _ in range(cnt):
            x = param_refs[idx][...].astype(jnp.float32)
            ss = ss + jnp.sum(x * x)                      # VPU mul + XLU reduce
            idx += 1
        out = jnp.where(lane == g, lam * jnp.sqrt(ss), out)

    # Objective: MSE over the full (batch, seq) score map.
    d = yp_ref[...].astype(jnp.float32) - yt_ref[...].astype(jnp.float32)
    mse = jnp.sum(d * d) * (1.0 / mse_denom)
    out = jnp.where(lane == len(group_counts), mse, out)

    o_ref[...] = out              # single unmasked, lane-dense (1,128) store


# --------------------------- jitted forward wrapper ------------------------- #

def _to_2d_f32(x):
    """Present every parameter as a 2D f32 array (biases -> (1, n))."""
    x = jnp.asarray(x, jnp.float32)
    if x.ndim == 0:
        return x.reshape(1, 1)
    if x.ndim == 1:
        return x.reshape(1, -1)
    if x.ndim > 2:
        return x.reshape(x.shape[0], -1)
    return x


@jax.jit
def _regularized_loss_fwd(params, y_pred, y_true, lam):
    """Returns (objective, reg_terms[5]) from ONE fused pallas_call."""
    group_names = ("gc1", "gc2", "gc3", "weight_1", "weight_2")

    flat_params, group_counts = [], []
    for name in group_names:
        arrs = [_to_2d_f32(p) for p in params[name]]
        group_counts.append(len(arrs))
        flat_params.extend(arrs)
    group_counts = tuple(group_counts)

    batch, seq = y_pred.shape
    kernel = functools.partial(
        _fused_loss_kernel,
        group_counts=group_counts,
        mse_denom=float(batch * seq),
    )

    n_param_elems = sum(int(p.size) for p in flat_params)
    cost = pl.CostEstimate(
        flops=2 * n_param_elems + 3 * int(y_pred.size),
        transcendentals=len(group_counts),
        bytes_accessed=4 * (n_param_elems + 2 * int(y_pred.size) + _LANES + 1),
    )

    # lambdas in SMEM (no recompile when it changes); everything else full-array
    # VMEM blocks (no grid -> single invocation, single DMA per operand).
    in_specs = [pl.BlockSpec(memory_space=pltpu.MemorySpace.SMEM)]
    in_specs += [pl.BlockSpec(memory_space=pltpu.MemorySpace.VMEM)
                 for _ in flat_params]
    in_specs += [pl.BlockSpec(memory_space=pltpu.MemorySpace.VMEM),
                 pl.BlockSpec(memory_space=pltpu.MemorySpace.VMEM)]

    out = pl.pallas_call(
        kernel,
        out_shape=jax.ShapeDtypeStruct((1, _LANES), jnp.float32),
        in_specs=in_specs,
        out_specs=pl.BlockSpec(memory_space=pltpu.MemorySpace.VMEM),
        cost_estimate=cost,
    )(
        jnp.asarray(lam, jnp.float32).reshape(1, 1),
        *flat_params,
        y_pred.astype(jnp.float32),
        y_true.astype(jnp.float32),
    )

    reg_terms = out[0, :len(group_counts)]   # l1..l5 regularization (lanes 0-4)
    objective = out[0, len(group_counts)]    # returned loss (lane 5)
    return objective, reg_terms


# --------------------------- RegularizedLoss (JAX) -------------------------- #

class RegularizedLoss:
    """JAX/Pallas port of the PyTorch RegularizedLoss.forward semantics.

    The five L2 regularization terms are computed inside the SAME fused Pallas
    kernel as the objective but (matching the reference) are NOT added to the
    returned loss; __call__ returns objective(y_pred, y_true, ...).
    """

    def __init__(self, model_params, original_objective=None, lambdas=0.001):
        # TODO(synk): `original_objective` is an injected callable in the
        # PyTorch module; a deterministic MSE objective fused into the kernel
        # is the synthetic stand-in, so the argument is unused here.
        del original_objective
        self.lambdas = jnp.asarray(lambdas, jnp.float32).reshape(1, 1)
        self.params = model_params   # dict: name -> list of arrays (weight, bias)

    def __call__(self, y_pred, y_true, adj, vid):
        del adj, vid   # the MSE stand-in objective ignores these
        objective, _reg_terms = _regularized_loss_fwd(
            self.params, y_pred, y_true, self.lambdas)
        return objective


# ---------------------------------- main ------------------------------------ #

if __name__ == "__main__":
    key = jax.random.PRNGKey(0)
    keys = jax.random.split(key, 16)

    feat, hid1, hid2 = 32, 32, 16
    batch, seq = 2, 32

    # Deterministic synthetic parameters (shapes implied by the anomaly
    # detector model: two linear "weight" layers + three graph-conv layers).
    model_params = {
        "weight_1": [jax.random.normal(keys[0], (hid2, feat), jnp.float32) * 0.1,
                     jax.random.normal(keys[1], (hid2,), jnp.float32) * 0.1],
        "weight_2": [jax.random.normal(keys[2], (1, hid2), jnp.float32) * 0.1,
                     jax.random.normal(keys[3], (1,), jnp.float32) * 0.1],
        "gc1": [jax.random.normal(keys[4], (feat, hid1), jnp.float32) * 0.1,
                jax.random.normal(keys[5], (hid1,), jnp.float32) * 0.1],
        "gc2": [jax.random.normal(keys[6], (hid1, hid2), jnp.float32) * 0.1,
                jax.random.normal(keys[7], (hid2,), jnp.float32) * 0.1],
        "gc3": [jax.random.normal(keys[8], (hid2, 1), jnp.float32) * 0.1,
                jax.random.normal(keys[9], (1,), jnp.float32) * 0.1],
    }

    y_pred = jax.nn.sigmoid(jax.random.normal(keys[10], (batch, seq), jnp.float32))
    y_true = (jax.random.uniform(keys[11], (batch, seq)) > 0.5).astype(jnp.float32)
    adj = jax.random.uniform(keys[12], (seq, seq), jnp.float32)
    vid = jnp.arange(batch, dtype=jnp.int32)

    loss_fn = RegularizedLoss(model_params, lambdas=0.001)
    loss = loss_fn(y_pred, y_true, adj, vid)
    jax.block_until_ready(loss)

    # plain-JAX reference check (MSE objective + five L2 norms)
    ref_loss = jnp.mean((y_pred - y_true) ** 2)
    assert jnp.allclose(loss, ref_loss, rtol=1e-4, atol=1e-5), (loss, ref_loss)

    _obj, regs = _regularized_loss_fwd(model_params, y_pred, y_true,
                                       jnp.float32(0.001))
    ref_regs = jnp.stack([
        0.001 * jnp.linalg.norm(
            jnp.concatenate([p.reshape(-1) for p in model_params[k]]))
        for k in ("gc1", "gc2", "gc3", "weight_1", "weight_2")])
    assert jnp.allclose(regs, ref_regs, rtol=1e-4, atol=1e-5), (regs, ref_regs)

    print("KERNEL_OK")
</pallas_src>

<mosaic_0001>
module attributes {stable_mosaic.version = 11 : i64} {
  func.func @_fused_loss_kernel(%arg0: memref<1x1xf32, #tpu.memory_space<smem>>, %arg1: memref<32x32xf32, #tpu.memory_space<vmem>>, %arg2: memref<1x32xf32, #tpu.memory_space<vmem>>, %arg3: memref<32x16xf32, #tpu.memory_space<vmem>>, %arg4: memref<1x16xf32, #tpu.memory_space<vmem>>, %arg5: memref<16x1xf32, #tpu.memory_space<vmem>>, %arg6: memref<1x1xf32, #tpu.memory_space<vmem>>, %arg7: memref<16x32xf32, #tpu.memory_space<vmem>>, %arg8: memref<1x16xf32, #tpu.memory_space<vmem>>, %arg9: memref<1x16xf32, #tpu.memory_space<vmem>>, %arg10: memref<1x1xf32, #tpu.memory_space<vmem>>, %arg11: memref<2x32xf32, #tpu.memory_space<vmem>>, %arg12: memref<2x32xf32, #tpu.memory_space<vmem>>, %arg13: memref<1x128xf32, #tpu.memory_space<vmem>>) attributes {dimension_semantics = [], scalar_prefetch = 0 : i64, scratch_operands = 0 : i64, tpu.core_type = #tpu.core_type<tc>} {
    %c0 = arith.constant 0 : index
    %c0_0 = arith.constant 0 : index
    %0 = memref.load %arg0[%c0, %c0_0] : memref<1x1xf32, #tpu.memory_space<smem>>
    %1 = tpu.iota {dimensions = array<i32: 1>} : vector<1x128xi32>
    %cst = arith.constant 0.000000e+00 : f32
    %2 = vector.broadcast %cst : f32 to vector<1x128xf32>
    %c0_1 = arith.constant 0 : index
    %c0_2 = arith.constant 0 : index
    %3 = vector.load %arg1[%c0_1, %c0_2] : memref<32x32xf32, #tpu.memory_space<vmem>>, vector<32x32xf32>
    %4 = arith.mulf %3, %3 : vector<32x32xf32>
    %5 = vector.shape_cast %4 : vector<32x32xf32> to vector<1x32x32xf32>
    %cst_3 = arith.constant dense<0.000000e+00> : vector<1xf32>
    %6 = vector.multi_reduction <add>, %5, %cst_3 [1, 2] : vector<1x32x32xf32> to vector<1xf32>
    %7 = vector.shape_cast %6 : vector<1xf32> to vector<1x1x1xf32>
    %8 = vector.extract %7[0, 0, 0] : f32 from vector<1x1x1xf32>
    %cst_4 = arith.constant 0.000000e+00 : f32
    %9 = arith.addf %cst_4, %8 : f32
    %c0_5 = arith.constant 0 : index
    %c0_6 = arith.constant 0 : index
    %10 = vector.load %arg2[%c0_5, %c0_6] : memref<1x32xf32, #tpu.memory_space<vmem>>, vector<1x32xf32>
    %11 = arith.mulf %10, %10 : vector<1x32xf32>
    %12 = vector.shape_cast %11 : vector<1x32xf32> to vector<1x1x32xf32>
    %cst_7 = arith.constant dense<0.000000e+00> : vector<1xf32>
    %13 = vector.multi_reduction <add>, %12, %cst_7 [1, 2] : vector<1x1x32xf32> to vector<1xf32>
    %14 = vector.shape_cast %13 : vector<1xf32> to vector<1x1x1xf32>
    %15 = vector.extract %14[0, 0, 0] : f32 from vector<1x1x1xf32>
    %16 = arith.addf %9, %15 : f32
    %c0_i32 = arith.constant 0 : i32
    %17 = vector.broadcast %c0_i32 : i32 to vector<1x128xi32>
    %18 = arith.cmpi eq, %1, %17 : vector<1x128xi32>
    %19 = math.sqrt %16 : f32
    %20 = arith.mulf %0, %19 : f32
    %21 = vector.broadcast %20 : f32 to vector<1x128xf32>
    %22 = arith.select %18, %21, %2 : vector<1x128xi1>, vector<1x128xf32>
    %c0_8 = arith.constant 0 : index
    %c0_9 = arith.constant 0 : index
    %23 = vector.load %arg3[%c0_8, %c0_9] : memref<32x16xf32, #tpu.memory_space<vmem>>, vector<32x16xf32>
    %24 = arith.mulf %23, %23 : vector<32x16xf32>
    %25 = vector.shape_cast %24 : vector<32x16xf32> to vector<1x32x16xf32>
    %cst_10 = arith.constant dense<0.000000e+00> : vector<1xf32>
    %26 = vector.multi_reduction <add>, %25, %cst_10 [1, 2] : vector<1x32x16xf32> to vector<1xf32>
    %27 = vector.shape_cast %26 : vector<1xf32> to vector<1x1x1xf32>
    %28 = vector.extract %27[0, 0, 0] : f32 from vector<1x1x1xf32>
    %cst_11 = arith.constant 0.000000e+00 : f32
    %29 = arith.addf %cst_11, %28 : f32
    %c0_12 = arith.constant 0 : index
    %c0_13 = arith.constant 0 : index
    %30 = vector.load %arg4[%c0_12, %c0_13] : memref<1x16xf32, #tpu.memory_space<vmem>>, vector<1x16xf32>
    %31 = arith.mulf %30, %30 : vector<1x16xf32>
    %32 = vector.shape_cast %31 : vector<1x16xf32> to vector<1x1x16xf32>
    %cst_14 = arith.constant dense<0.000000e+00> : vector<1xf32>
    %33 = vector.multi_reduction <add>, %32, %cst_14 [1, 2] : vector<1x1x16xf32> to vector<1xf32>
    %34 = vector.shape_cast %33 : vector<1xf32> to vector<1x1x1xf32>
    %35 = vector.extract %34[0, 0, 0] : f32 from vector<1x1x1xf32>
    %36 = arith.addf %29, %35 : f32
    %c1_i32 = arith.constant 1 : i32
    %37 = vector.broadcast %c1_i32 : i32 to vector<1x128xi32>
    %38 = arith.cmpi eq, %1, %37 : vector<1x128xi32>
    %39 = math.sqrt %36 : f32
    %40 = arith.mulf %0, %39 : f32
    %41 = vector.broadcast %40 : f32 to vector<1x128xf32>
    %42 = arith.select %38, %41, %22 : vector<1x128xi1>, vector<1x128xf32>
    %c0_15 = arith.constant 0 : index
    %c0_16 = arith.constant 0 : index
    %43 = vector.load %arg5[%c0_15, %c0_16] : memref<16x1xf32, #tpu.memory_space<vmem>>, vector<16x1xf32>
    %44 = arith.mulf %43, %43 : vector<16x1xf32>
    %45 = vector.shape_cast %44 : vector<16x1xf32> to vector<1x16x1xf32>
    %cst_17 = arith.constant dense<0.000000e+00> : vector<1xf32>
    %46 = vector.multi_reduction <add>, %45, %cst_17 [1, 2] : vector<1x16x1xf32> to vector<1xf32>
    %47 = vector.shape_cast %46 : vector<1xf32> to vector<1x1x1xf32>
    %48 = vector.extract %47[0, 0, 0] : f32 from vector<1x1x1xf32>
    %cst_18 = arith.constant 0.000000e+00 : f32
    %49 = arith.addf %cst_18, %48 : f32
    %c0_19 = arith.constant 0 : index
    %c0_20 = arith.constant 0 : index
    %50 = vector.load %arg6[%c0_19, %c0_20] : memref<1x1xf32, #tpu.memory_space<vmem>>, vector<1x1xf32>
    %51 = arith.mulf %50, %50 : vector<1x1xf32>
    %52 = vector.shape_cast %51 : vector<1x1xf32> to vector<1x1x1xf32>
    %cst_21 = arith.constant dense<0.000000e+00> : vector<1xf32>
    %53 = vector.multi_reduction <add>, %52, %cst_21 [1, 2] : vector<1x1x1xf32> to vector<1xf32>
    %54 = vector.shape_cast %53 : vector<1xf32> to vector<1x1x1xf32>
    %55 = vector.extract %54[0, 0, 0] : f32 from vector<1x1x1xf32>
    %56 = arith.addf %49, %55 : f32
    %c2_i32 = arith.constant 2 : i32
    %57 = vector.broadcast %c2_i32 : i32 to vector<1x128xi32>
    %58 = arith.cmpi eq, %1, %57 : vector<1x128xi32>
    %59 = math.sqrt %56 : f32
    %60 = arith.mulf %0, %59 : f32
    %61 = vector.broadcast %60 : f32 to vector<1x128xf32>
    %62 = arith.select %58, %61, %42 : vector<1x128xi1>, vector<1x128xf32>
    %c0_22 = arith.constant 0 : index
    %c0_23 = arith.constant 0 : index
    %63 = vector.load %arg7[%c0_22, %c0_23] : memref<16x32xf32, #tpu.memory_space<vmem>>, vector<16x32xf32>
    %64 = arith.mulf %63, %63 : vector<16x32xf32>
    %65 = vector.shape_cast %64 : vector<16x32xf32> to vector<1x16x32xf32>
    %cst_24 = arith.constant dense<0.000000e+00> : vector<1xf32>
    %66 = vector.multi_reduction <add>, %65, %cst_24 [1, 2] : vector<1x16x32xf32> to vector<1xf32>
    %67 = vector.shape_cast %66 : vector<1xf32> to vector<1x1x1xf32>
    %68 = vector.extract %67[0, 0, 0] : f32 from vector<1x1x1xf32>
    %cst_25 = arith.constant 0.000000e+00 : f32
    %69 = arith.addf %cst_25, %68 : f32
    %c0_26 = arith.constant 0 : index
    %c0_27 = arith.constant 0 : index
    %70 = vector.load %arg8[%c0_26, %c0_27] : memref<1x16xf32, #tpu.memory_space<vmem>>, vector<1x16xf32>
    %71 = arith.mulf %70, %70 : vector<1x16xf32>
    %72 = vector.shape_cast %71 : vector<1x16xf32> to vector<1x1x16xf32>
    %cst_28 = arith.constant dense<0.000000e+00> : vector<1xf32>
    %73 = vector.multi_reduction <add>, %72, %cst_28 [1, 2] : vector<1x1x16xf32> to vector<1xf32>
    %74 = vector.shape_cast %73 : vector<1xf32> to vector<1x1x1xf32>
    %75 = vector.extract %74[0, 0, 0] : f32 from vector<1x1x1xf32>
    %76 = arith.addf %69, %75 : f32
    %c3_i32 = arith.constant 3 : i32
    %77 = vector.broadcast %c3_i32 : i32 to vector<1x128xi32>
    %78 = arith.cmpi eq, %1, %77 : vector<1x128xi32>
    %79 = math.sqrt %76 : f32
    %80 = arith.mulf %0, %79 : f32
    %81 = vector.broadcast %80 : f32 to vector<1x128xf32>
    %82 = arith.select %78, %81, %62 : vector<1x128xi1>, vector<1x128xf32>
    %c0_29 = arith.constant 0 : index
    %c0_30 = arith.constant 0 : index
    %83 = vector.load %arg9[%c0_29, %c0_30] : memref<1x16xf32, #tpu.memory_space<vmem>>, vector<1x16xf32>
    %84 = arith.mulf %83, %83 : vector<1x16xf32>
    %85 = vector.shape_cast %84 : vector<1x16xf32> to vector<1x1x16xf32>
    %cst_31 = arith.constant dense<0.000000e+00> : vector<1xf32>
    %86 = vector.multi_reduction <add>, %85, %cst_31 [1, 2] : vector<1x1x16xf32> to vector<1xf32>
    %87 = vector.shape_cast %86 : vector<1xf32> to vector<1x1x1xf32>
    %88 = vector.extract %87[0, 0, 0] : f32 from vector<1x1x1xf32>
    %cst_32 = arith.constant 0.000000e+00 : f32
    %89 = arith.addf %cst_32, %88 : f32
    %c0_33 = arith.constant 0 : index
    %c0_34 = arith.constant 0 : index
    %90 = vector.load %arg10[%c0_33, %c0_34] : memref<1x1xf32, #tpu.memory_space<vmem>>, vector<1x1xf32>
    %91 = arith.mulf %90, %90 : vector<1x1xf32>
    %92 = vector.shape_cast %91 : vector<1x1xf32> to vector<1x1x1xf32>
    %cst_35 = arith.constant dense<0.000000e+00> : vector<1xf32>
    %93 = vector.multi_reduction <add>, %92, %cst_35 [1, 2] : vector<1x1x1xf32> to vector<1xf32>
    %94 = vector.shape_cast %93 : vector<1xf32> to vector<1x1x1xf32>
    %95 = vector.extract %94[0, 0, 0] : f32 from vector<1x1x1xf32>
    %96 = arith.addf %89, %95 : f32
    %c4_i32 = arith.constant 4 : i32
    %97 = vector.broadcast %c4_i32 : i32 to vector<1x128xi32>
    %98 = arith.cmpi eq, %1, %97 : vector<1x128xi32>
    %99 = math.sqrt %96 : f32
    %100 = arith.mulf %0, %99 : f32
    %101 = vector.broadcast %100 : f32 to vector<1x128xf32>
    %102 = arith.select %98, %101, %82 : vector<1x128xi1>, vector<1x128xf32>
    %c0_36 = arith.constant 0 : index
    %c0_37 = arith.constant 0 : index
    %103 = vector.load %arg11[%c0_36, %c0_37] : memref<2x32xf32, #tpu.memory_space<vmem>>, vector<2x32xf32>
    %c0_38 = arith.constant 0 : index
    %c0_39 = arith.constant 0 : index
    %104 = vector.load %arg12[%c0_38, %c0_39] : memref<2x32xf32, #tpu.memory_space<vmem>>, vector<2x32xf32>
    %105 = arith.subf %103, %104 : vector<2x32xf32>
    %106 = arith.mulf %105, %105 : vector<2x32xf32>
    %107 = vector.shape_cast %106 : vector<2x32xf32> to vector<1x2x32xf32>
    %cst_40 = arith.constant dense<0.000000e+00> : vector<1xf32>
    %108 = vector.multi_reduction <add>, %107, %cst_40 [1, 2] : vector<1x2x32xf32> to vector<1xf32>
    %109 = vector.shape_cast %108 : vector<1xf32> to vector<1x1x1xf32>
    %110 = vector.extract %109[0, 0, 0] : f32 from vector<1x1x1xf32>
    %cst_41 = arith.constant 1.562500e-02 : f32
    %111 = arith.mulf %110, %cst_41 : f32
    %c5_i32 = arith.constant 5 : i32
    %112 = vector.broadcast %c5_i32 : i32 to vector<1x128xi32>
    %113 = arith.cmpi eq, %1, %112 : vector<1x128xi32>
    %114 = vector.broadcast %111 : f32 to vector<1x128xf32>
    %115 = arith.select %113, %114, %102 : vector<1x128xi1>, vector<1x128xf32>
    %c0_42 = arith.constant 0 : index
    %c0_43 = arith.constant 0 : index
    %116 = vector.load %arg13[%c0_42, %c0_43] : memref<1x128xf32, #tpu.memory_space<vmem>>, vector<1x128xf32>
    tpu.vector_store %arg13[%c0_42, %c0_43], %115 {strides = array<i32>} : memref<1x128xf32, #tpu.memory_space<vmem>>, vector<1x128xf32>,
    return
  }
}

</mosaic_0001>

<llo_original>
// kernel: _regularized_loss_fwd.1
$region0: #{_regularized_loss_fwd.1}
  #allocation0 [shape = 'u32[]', space=smem, size = 0x4, offset = 0x4, fixed_abs, tag = 'smem constant byte address 0x4 - core index']
  #allocation1 [shape = 'u32[72,128]{1,0:T(1,128)}', space=vmem, size = 0x9000, scoped, tag = 'internal scratch']
  #allocation2 [shape = 'f32[1,1]{1,0:T(1,128)S(6)}', space=smem, size = 0x200, scoped, tag = 'scoped memory for _regularized_loss_fwd.1']
  #allocation3 [shape = 'f32[1,1]{1,0:T(1,128)S(1)}', space=vmem, size = 0x200, scoped, tag = 'scoped memory for _regularized_loss_fwd.1']
  #allocation4 [shape = 'f32[1,1]{1,0:T(1,128)S(1)}', space=vmem, size = 0x200, scoped, tag = 'scoped memory for _regularized_loss_fwd.1']
  %s0 = inlined_call_operand.<no memory space> [shape: f32[1,1], index: 0, kind: input, shape index: {}]
  %s1 = inlined_call_operand.vmem [shape: f32[32,32], index: 1, kind: input, shape index: {}]
  %s2 = inlined_call_operand.vmem [shape: f32[1,32], index: 2, kind: input, shape index: {}]
  %s3 = inlined_call_operand.vmem [shape: f32[32,16], index: 3, kind: input, shape index: {}]
  %s4 = inlined_call_operand.vmem [shape: f32[1,16], index: 4, kind: input, shape index: {}]
  %s5 = inlined_call_operand.vmem [shape: f32[16,1], index: 5, kind: input, shape index: {}]
  %s6 = inlined_call_operand.<no memory space> [shape: f32[1,1], index: 6, kind: input, shape index: {}]
  %s7 = inlined_call_operand.vmem [shape: f32[16,32], index: 7, kind: input, shape index: {}]
  %s8 = inlined_call_operand.vmem [shape: f32[1,16], index: 8, kind: input, shape index: {}]
  %s9 = inlined_call_operand.vmem [shape: f32[1,16], index: 9, kind: input, shape index: {}]
  %s10 = inlined_call_operand.<no memory space> [shape: f32[1,1], index: 10, kind: input, shape index: {}]
  %s11 = inlined_call_operand.vmem [shape: f32[2,32], index: 11, kind: input, shape index: {}]
  %s12 = inlined_call_operand.vmem [shape: f32[2,32], index: 12, kind: input, shape index: {}]
  %s13 = inlined_call_operand.vmem [shape: f32[1,128], index: 13, kind: output, shape index: {}]
  %s14 = sld [smem:[#allocation0]]
  $region62: #{_regularized_loss_fwd.1} parent=0
    _
  %s16 = ssub.s32 1, %s14
  %s17 = scalar_select 0, %s16, %s14
  %18 = sst [smem:[#allocation2]] %s0
  %v19 = vstv %s6
  %20 = vst [vmem:[#allocation3] sm:$0x1] %v19
  %v21 = vstv %s10
  %22 = vst [vmem:[#allocation4] sm:$0x1] %v21
  // Predicated region
  $region2: #{_regularized_loss_fwd.1} parent=0 // pred_check
    _
  $region3: #{_regularized_loss_fwd.1} parent=0 // pred_check_branch
    %24 = sbr.rel (0) target = $region5
  $region4: #{_regularized_loss_fwd.1} parent=0 // pred_region
    _
  $region5: #{_regularized_loss_fwd.1} parent=0 // pred_fallthru
    _
  // Predicated region
  $region6: #{_regularized_loss_fwd.1} parent=0 // pred_check
    _
  $region7: #{_regularized_loss_fwd.1} parent=0 // pred_check_branch
    %26 = sbr.rel (0) target = $region9
  $region8: #{_regularized_loss_fwd.1} parent=0 // pred_region
    _
  $region9: #{_regularized_loss_fwd.1} parent=0 // pred_fallthru
    _
  // Predicated region
  $region10: #{_regularized_loss_fwd.1} parent=0 // pred_check
    _
  $region11: #{_regularized_loss_fwd.1} parent=0 // pred_check_branch
    %28 = sbr.rel (0) target = $region13
  $region12: #{_regularized_loss_fwd.1} parent=0 // pred_region
    _
  $region13: #{_regularized_loss_fwd.1} parent=0 // pred_fallthru
    _
  // Predicated region
  $region14: #{_regularized_loss_fwd.1} parent=0 // pred_check
    _
  $region15: #{_regularized_loss_fwd.1} parent=0 // pred_check_branch
    %30 = sbr.rel (0) target = $region17
  $region16: #{_regularized_loss_fwd.1} parent=0 // pred_region
    _
  $region17: #{_regularized_loss_fwd.1} parent=0 // pred_fallthru
    _
  // Predicated region
  $region18: #{_regularized_loss_fwd.1} parent=0 // pred_check
    _
  $region19: #{_regularized_loss_fwd.1} parent=0 // pred_check_branch
    %32 = sbr.rel (0) target = $region21
  $region20: #{_regularized_loss_fwd.1} parent=0 // pred_region
    _
  $region21: #{_regularized_loss_fwd.1} parent=0 // pred_fallthru
    _
  // Predicated region
  $region22: #{_regularized_loss_fwd.1} parent=0 // pred_check
    _
  $region23: #{_regularized_loss_fwd.1} parent=0 // pred_check_branch
    %34 = sbr.rel (0) target = $region25
  $region24: #{_regularized_loss_fwd.1} parent=0 // pred_region
    _
  $region25: #{_regularized_loss_fwd.1} parent=0 // pred_fallthru
    _
  // Predicated region
  $region26: #{_regularized_loss_fwd.1} parent=0 // pred_check
    _
  $region27: #{_regularized_loss_fwd.1} parent=0 // pred_check_branch
    %36 = sbr.rel (0) target = $region29
  $region28: #{_regularized_loss_fwd.1} parent=0 // pred_region
    _
  $region29: #{_regularized_loss_fwd.1} parent=0 // pred_fallthru
    _
  // Predicated region
  $region30: #{_regularized_loss_fwd.1} parent=0 // pred_check
    _
  $region31: #{_regularized_loss_fwd.1} parent=0 // pred_check_branch
    %38 = sbr.rel (0) target = $region33
  $region32: #{_regularized_loss_fwd.1} parent=0 // pred_region
    _
  $region33: #{_regularized_loss_fwd.1} parent=0 // pred_fallthru
    _
  // Predicated region
  $region34: #{_regularized_loss_fwd.1} parent=0 // pred_check
    _
  $region35: #{_regularized_loss_fwd.1} parent=0 // pred_check_branch
    %40 = sbr.rel (0) target = $region37
  $region36: #{_regularized_loss_fwd.1} parent=0 // pred_region
    _
  $region37: #{_regularized_loss_fwd.1} parent=0 // pred_fallthru
    _
  // Predicated region
  $region38: #{_regularized_loss_fwd.1} parent=0 // pred_check
    _
  $region39: #{_regularized_loss_fwd.1} parent=0 // pred_check_branch
    %42 = sbr.rel (0) target = $region41
  $region40: #{_regularized_loss_fwd.1} parent=0 // pred_region
    _
  $region41: #{_regularized_loss_fwd.1} parent=0 // pred_fallthru
    _
  // Predicated region
  $region42: #{_regularized_loss_fwd.1} parent=0 // pred_check
    _
  $region43: #{_regularized_loss_fwd.1} parent=0 // pred_check_branch
    %44 = sbr.rel (0) target = $region45
  $region44: #{_regularized_loss_fwd.1} parent=0 // pred_region
    _
  $region45: #{_regularized_loss_fwd.1} parent=0 // pred_fallthru
    _
  // Predicated region
  $region46: #{_regularized_loss_fwd.1} parent=0 // pred_check
    _
  $region47: #{_regularized_loss_fwd.1} parent=0 // pred_check_branch
    %46 = sbr.rel (0) target = $region49
  $region48: #{_regularized_loss_fwd.1} parent=0 // pred_region
    _
  $region49: #{_regularized_loss_fwd.1} parent=0 // pred_fallthru
    _
  // Predicated region
  $region50: #{_regularized_loss_fwd.1} parent=0 // pred_check
    _
  $region51: #{_regularized_loss_fwd.1} parent=0 // pred_check_branch
    %48 = sbr.rel (0) target = $region53
  $region52: #{_regularized_loss_fwd.1} parent=0 // pred_region
    _
  $region53: #{_regularized_loss_fwd.1} parent=0 // pred_fallthru
    _
  %s49 = sld [smem:[#allocation2]]
  %v50 = vlaneseq
  %v51 = vand.u32 %v50, 127
  %v52 = vld [vmem:[%s1] sm:$0xff]
  %v53 = vld [vmem:[%s1 + $0x8] sm:$0xff]
  %v54 = vld [vmem:[%s1 + $0x10] sm:$0xff]
  %v55 = vld [vmem:[%s1 + $0x18] sm:$0xff]
  %v56 = vmul.f32 %v52, %v52
  %v57 = vmul.f32 %v53, %v53
  %v58 = vmul.f32 %v54, %v54
  %v59 = vmul.f32 %v55, %v55
  %vm60 = vcmask 261120
  %v61 = vsel %vm60, %v56, 0.0
  %v62 = vsel %vm60, %v57, 0.0
  %v63 = vadd.f32 %v61, %v62
  %v64 = vsel %vm60, %v58, 0.0
  %v65 = vadd.f32 %v63, %v64
  %v66 = vsel %vm60, %v59, 0.0
  %v67 = vadd.f32 %v65, %v66
  %68 = vadd.xlane.f32.xlu0 %v67
  %v69 = vpop.xlane.xlu0 %68
  %v70 = vrot.slane %v69, 4
  %v71 = vadd.f32 %v69, %v70
  %v72 = vrot.slane %v71, 2
  %v73 = vadd.f32 %v71, %v72
  %v74 = vrot.slane %v73, 1
  %v75 = vadd.f32 %v73, %v74
  %s76 = vtos %v75
  %s77 = sadd.f32 %s76, 0.0
  %v78 = vld [vmem:[%s2] sm:$0x1]
  %v79 = vmul.f32 %v78, %v78
  %vm80 = vcmask 253952
  %v81 = vsel %vm80, %v79, 0.0
  %82 = vadd.xlane.f32.xlu0 %v81
  %v83 = vpop.xlane.xlu0 %82
  %v84 = vrot.slane %v83, 4
  %v85 = vadd.f32 %v83, %v84
  %v86 = vrot.slane %v85, 2
  %v87 = vadd.f32 %v85, %v86
  %v88 = vrot.slane %v87, 1
  %v89 = vadd.f32 %v87, %v88
  %s90 = vtos %v89
  %s91 = sadd.f32 %s77, %s90
  %vm92 = vcmp.eq.s32.totalorder %v51, 0
  %v93 = vstv %s91
  %v94 = vrsqrt.pop %v93
  %v95 = vmul.f32 %v94, %v93
  %v96 = vmul.f32 %v95, %v94
  %v97 = vmul.f32 0.5, %v96
  %v98 = vsub.f32 1.5, %v97
  %v99 = vmul.f32 %v94, %v98
  %v100 = vmul.f32 %v93, %v99
  %vm101 = vcmp.eq.f32.partialorder %v93, inf
  %v102 = vsel %vm101, %v93, %v100
  %vm103 = vcmp.eq.f32.partialorder %v93, 0.0
  %v104 = vand.u32 %v93, 2147483648
  %v105 = vsel %vm103, %v104, %v102
  %s106 = vtos %v105
  %s107 = smul.f32 %s49, %s106
  %v108 = vstv %s107
  %v109 = vsel %vm92, %v108, 0.0
  %v110 = vld [vmem:[%s3] sm:$0xff]
  %v111 = vld [vmem:[%s3 + $0x8] sm:$0xff]
  %v112 = vld [vmem:[%s3 + $0x10] sm:$0xff]
  %v113 = vld [vmem:[%s3 + $0x18] sm:$0xff]
  %v114 = vmul.f32 %v110, %v110
  %v115 = vmul.f32 %v111, %v111
  %v116 = vmul.f32 %v112, %v112
  %v117 = vmul.f32 %v113, %v113
  %vm118 = vcmask 130048
  %v119 = vsel %vm118, %v114, 0.0
  %v120 = vsel %vm118, %v115, 0.0
  %v121 = vadd.f32 %v119, %v120
  %v122 = vsel %vm118, %v116, 0.0
  %v123 = vadd.f32 %v121, %v122
  %v124 = vsel %vm118, %v117, 0.0
  %v125 = vadd.f32 %v123, %v124
  %126 = vadd.xlane.f32.xlu0 %v125
  %v127 = vpop.xlane.xlu0 %126
  %v128 = vrot.slane %v127, 4
  %v129 = vadd.f32 %v127, %v128
  %v130 = vrot.slane %v129, 2
  %v131 = vadd.f32 %v129, %v130
  %v132 = vrot.slane %v131, 1
  %v133 = vadd.f32 %v131, %v132
  %s134 = vtos %v133
  %s135 = sadd.f32 %s134, 0.0
  %v136 = vld [vmem:[%s4] sm:$0x1]
  %v137 = vmul.f32 %v136, %v136
  %vm138 = vcmask 122880
  %v139 = vsel %vm138, %v137, 0.0
  %140 = vadd.xlane.f32.xlu0 %v139
  %v141 = vpop.xlane.xlu0 %140
  %v142 = vrot.slane %v141, 4
  %v143 = vadd.f32 %v141, %v142
  %v144 = vrot.slane %v143, 2
  %v145 = vadd.f32 %v143, %v144
  %v146 = vrot.slane %v145, 1
  %v147 = vadd.f32 %v145, %v146
  %s148 = vtos %v147
  %s149 = sadd.f32 %s135, %s148
  %vm150 = vcmp.eq.s32.totalorder %v51, 1
  %v151 = vstv %s149
  %v152 = vrsqrt.pop %v151
  %v153 = vmul.f32 %v152, %v151
  %v154 = vmul.f32 %v153, %v152
  %v155 = vmul.f32 0.5, %v154
  %v156 = vsub.f32 1.5, %v155
  %v157 = vmul.f32 %v152, %v156
  %v158 = vmul.f32 %v151, %v157
  %vm159 = vcmp.eq.f32.partialorder %v151, inf
  %v160 = vsel %vm159, %v151, %v158
  %vm161 = vcmp.eq.f32.partialorder %v151, 0.0
  %v162 = vand.u32 %v151, 2147483648
  %v163 = vsel %vm161, %v162, %v160
  %s164 = vtos %v163
  %s165 = smul.f32 %s49, %s164
  %v166 = vstv %s165
  %v167 = vsel %vm150, %v166, %v109
  %v168 = vld [vmem:[%s5] sm:$0xff]
  %v169 = vld [vmem:[%s5 + $0x8] sm:$0xff]
  %v170 = vmul.f32 %v168, %v168
  %v171 = vmul.f32 %v169, %v169
  %vm172 = vcmask 7168
  %v173 = vsel %vm172, %v170, 0.0
  %v174 = vsel %vm172, %v171, 0.0
  %v175 = vadd.f32 %v173, %v174
  %176 = vadd.xlane.f32.xlu0 %v175
  %v177 = vpop.xlane.xlu0 %176
  %v178 = vrot.slane %v177, 4
  %v179 = vadd.f32 %v177, %v178
  %v180 = vrot.slane %v179, 2
  %v181 = vadd.f32 %v179, %v180
  %v182 = vrot.slane %v181, 1
  %v183 = vadd.f32 %v181, %v182
  %s184 = vtos %v183
  %s185 = sadd.f32 %s184, 0.0
  %v186 = vld [vmem:[#allocation3] sm:$0x1]
  %v187 = vmul.f32 %v186, %v186
  %v188 = vadd.f32 %v187, 0.0
  %s189 = vtos %v188
  %s190 = sadd.f32 %s185, %s189
  %vm191 = vcmp.eq.s32.totalorder %v51, 2
  %v192 = vstv %s190
  %v193 = vrsqrt.pop %v192
  %v194 = vmul.f32 %v193, %v192
  %v195 = vmul.f32 %v194, %v193
  %v196 = vmul.f32 0.5, %v195
  %v197 = vsub.f32 1.5, %v196
  %v198 = vmul.f32 %v193, %v197
  %v199 = vmul.f32 %v192, %v198
  %vm200 = vcmp.eq.f32.partialorder %v192, inf
  %v201 = vsel %vm200, %v192, %v199
  %vm202 = vcmp.eq.f32.partialorder %v192, 0.0
  %v203 = vand.u32 %v192, 2147483648
  %v204 = vsel %vm202, %v203, %v201
  %s205 = vtos %v204
  %s206 = smul.f32 %s49, %s205
  %v207 = vstv %s206
  %v208 = vsel %vm191, %v207, %v167
  %v209 = vld [vmem:[%s7] sm:$0xff]
  %v210 = vld [vmem:[%s7 + $0x8] sm:$0xff]
  %v211 = vmul.f32 %v209, %v209
  %v212 = vmul.f32 %v210, %v210
  %v213 = vsel %vm60, %v211, 0.0
  %v214 = vsel %vm60, %v212, 0.0
  %v215 = vadd.f32 %v213, %v214
  %216 = vadd.xlane.f32.xlu0 %v215
  %v217 = vpop.xlane.xlu0 %216
  %v218 = vrot.slane %v217, 4
  %v219 = vadd.f32 %v217, %v218
  %v220 = vrot.slane %v219, 2
  %v221 = vadd.f32 %v219, %v220
  %v222 = vrot.slane %v221, 1
  %v223 = vadd.f32 %v221, %v222
  %s224 = vtos %v223
  %s225 = sadd.f32 %s224, 0.0
  %v226 = vld [vmem:[%s8] sm:$0x1]
  %v227 = vmul.f32 %v226, %v226
  %v228 = vsel %vm138, %v227, 0.0
  %229 = vadd.xlane.f32.xlu0 %v228
  %v230 = vpop.xlane.xlu0 %229
  %v231 = vrot.slane %v230, 4
  %v232 = vadd.f32 %v230, %v231
  %v233 = vrot.slane %v232, 2
  %v234 = vadd.f32 %v232, %v233
  %v235 = vrot.slane %v234, 1
  %v236 = vadd.f32 %v234, %v235
  %s237 = vtos %v236
  %s238 = sadd.f32 %s225, %s237
  %vm239 = vcmp.eq.s32.totalorder %v51, 3
  %v240 = vstv %s238
  %v241 = vrsqrt.pop %v240
  %v242 = vmul.f32 %v241, %v240
  %v243 = vmul.f32 %v242, %v241
  %v244 = vmul.f32 0.5, %v243
  %v245 = vsub.f32 1.5, %v244
  %v246 = vmul.f32 %v241, %v245
  %v247 = vmul.f32 %v240, %v246
  %vm248 = vcmp.eq.f32.partialorder %v240, inf
  %v249 = vsel %vm248, %v240, %v247
  %vm250 = vcmp.eq.f32.partialorder %v240, 0.0
  %v251 = vand.u32 %v240, 2147483648
  %v252 = vsel %vm250, %v251, %v249
  %s253 = vtos %v252
  %s254 = smul.f32 %s49, %s253
  %v255 = vstv %s254
  %v256 = vsel %vm239, %v255, %v208
  %v257 = vld [vmem:[%s9] sm:$0x1]
  %v258 = vmul.f32 %v257, %v257
  %v259 = vsel %vm138, %v258, 0.0
  %260 = vadd.xlane.f32.xlu0 %v259
  %v261 = vpop.xlane.xlu0 %260
  %v262 = vrot.slane %v261, 4
  %v263 = vadd.f32 %v261, %v262
  %v264 = vrot.slane %v263, 2
  %v265 = vadd.f32 %v263, %v264
  %v266 = vrot.slane %v265, 1
  %v267 = vadd.f32 %v265, %v266
  %s268 = vtos %v267
  %s269 = sadd.f32 %s268, 0.0
  %v270 = vld [vmem:[#allocation4] sm:$0x1]
  %v271 = vmul.f32 %v270, %v270
  %v272 = vadd.f32 %v271, 0.0
  %s273 = vtos %v272
  %s274 = sadd.f32 %s269, %s273
  %vm275 = vcmp.eq.s32.totalorder %v51, 4
  %v276 = vstv %s274
  %v277 = vrsqrt.pop %v276
  %v278 = vmul.f32 %v277, %v276
  %v279 = vmul.f32 %v278, %v277
  %v280 = vmul.f32 0.5, %v279
  %v281 = vsub.f32 1.5, %v280
  %v282 = vmul.f32 %v277, %v281
  %v283 = vmul.f32 %v276, %v282
  %vm284 = vcmp.eq.f32.partialorder %v276, inf
  %v285 = vsel %vm284, %v276, %v283
  %vm286 = vcmp.eq.f32.partialorder %v276, 0.0
  %v287 = vand.u32 %v276, 2147483648
  %v288 = vsel %vm286, %v287, %v285
  %s289 = vtos %v288
  %s290 = smul.f32 %s49, %s289
  %v291 = vstv %s290
  %v292 = vsel %vm275, %v291, %v256
  %v293 = vld [vmem:[%s11] sm:$0x3]
  %v294 = vld [vmem:[%s12] sm:$0x3]
  %v295 = vsub.f32 %v293, %v294
  %v296 = vmul.f32 %v295, %v295
  %vm297 = vcmask 254976
  %v298 = vsel %vm297, %v296, 0.0
  %299 = vadd.xlane.f32.xlu0 %v298
  %v300 = vpop.xlane.xlu0 %299
  %v301 = vrot.slane %v300, 4
  %v302 = vadd.f32 %v300, %v301
  %v303 = vrot.slane %v302, 2
  %v304 = vadd.f32 %v302, %v303
  %v305 = vrot.slane %v304, 1
  %v306 = vadd.f32 %v304, %v305
  %s307 = vtos %v306
  %s308 = smul.f32 %s307, 0.015625
  %vm309 = vcmp.eq.s32.totalorder %v51, 5
  %v310 = vstv %s308
  %v311 = vsel %vm309, %v310, %v292
  %312 = vst [vmem:[%s13] sm:$0x1] %v311
  // Predicated region
  $region54: #{_regularized_loss_fwd.1} parent=0 // pred_check
    _
  $region55: #{_regularized_loss_fwd.1} parent=0 // pred_check_branch
    %314 = sbr.rel (0) target = $region57
  $region56: #{_regularized_loss_fwd.1} parent=0 // pred_region
    _
  $region57: #{_regularized_loss_fwd.1} parent=0 // pred_fallthru
    _
  // Predicated region
  $region58: #{_regularized_loss_fwd.1} parent=0 // pred_check
    _
  $region59: #{_regularized_loss_fwd.1} parent=0 // pred_check_branch
    %316 = sbr.rel (0) target = $region61
  $region60: #{_regularized_loss_fwd.1} parent=0 // pred_region
    _
  $region61: #{_regularized_loss_fwd.1} parent=0 // pred_fallthru
    _

</llo_original>
